<compile_context>
chip_gen: v6e
topology: v6e:2x2x1
jax: 0.10.0
libtpu: 0.0.40
codegen_flags: <defaults>
</compile_context>

<pallas_src>
import functools
import math

import jax
import jax.numpy as jnp
from jax.experimental import pallas as pl
from jax.experimental.pallas import tpu as pltpu


def _layernorm_kernel(x_ref, a_ref, b_ref, o_ref, *, eps: float):
    # x_ref: (TILE_ROWS, FEAT), a_ref/b_ref: (1, FEAT)
    x = x_ref[...].astype(jnp.float32)
    feat = x.shape[-1]

    mean = jnp.mean(x, axis=-1, keepdims=True)
    diff = x - mean
    # torch.std defaults to unbiased (divide by N-1); feat == 1 gives NaN,
    # matching torch.
    var = jnp.sum(diff * diff, axis=-1, keepdims=True) / jnp.float32(feat - 1)
    std = jnp.sqrt(var)

    # Per-row reciprocal (exact, (TILE_ROWS, 1)) -> only multiplies across the
    # full tile instead of FEAT divides per row.
    inv = pl.reciprocal(std + jnp.float32(eps), approx=False)

    a = a_ref[...].astype(jnp.float32)
    b = b_ref[...].astype(jnp.float32)
    y = diff * inv * a + b
    o_ref[...] = y.astype(o_ref.dtype)


def _sublane_for_dtype(dtype) -> int:
    itemsize = jnp.dtype(dtype).itemsize
    return max(8, 32 // max(itemsize, 1))  # f32->8, bf16->16, int8/fp8->32


def _select_tile_rows(rows: int, feat: int, in_itemsize: int,
                      out_itemsize: int, sublane: int) -> int:
    """Pick a target row tile: big enough to hide per-step overhead, small
    enough for VMEM (double-buffered in+out) and to keep several grid steps."""
    # Resident bytes ~= 2 buffers x (in tile + out tile).
    budget = 24 * 1024 * 1024
    per_row = 2 * feat * (in_itemsize + out_itemsize)
    max_vmem_rows = max(sublane, budget // max(per_row, 1))

    target = min(rows, max_vmem_rows, 2048)
    # Keep >= ~8 grid steps when rows allow it (pipelining + v7x megacore).
    if rows >= 8 * sublane:
        target = min(target, max(sublane, rows // 8))
    # Sublane-aligned.
    target = max(sublane, (target // sublane) * sublane)
    return target


def _largest_divisor_tile(rows: int, sublane: int, target: int):
    """Largest t <= target with t % sublane == 0 and rows % t == 0, else None."""
    t = (min(target, rows) // sublane) * sublane
    while t >= sublane:
        if rows % t == 0:
            return t
        t -= sublane
    return None


def layer_norm(x, a, b, eps=1e-6, tile_rows=None):
    """LayerNorm over the last axis of x, matching the given PyTorch module."""
    orig_shape = x.shape
    feat = orig_shape[-1]
    rows = int(math.prod(orig_shape[:-1])) if len(orig_shape) > 1 else 1

    x2 = x.reshape(rows, feat)
    a2 = a.reshape(1, feat)
    b2 = b.reshape(1, feat)

    in_itemsize = jnp.dtype(x.dtype).itemsize
    out_itemsize = in_itemsize
    sublane = _sublane_for_dtype(x.dtype)

    if rows <= sublane:
        # Tiny problem: one full block (block == full array dims is allowed).
        tile = rows
    elif tile_rows is not None:
        tile = min(tile_rows, rows)
    else:
        target = _select_tile_rows(rows, feat, in_itemsize, out_itemsize, sublane)
        tile = _largest_divisor_tile(rows, sublane, target)
        if tile is None:
            # No clean divisor: pad rows up to a multiple of the target tile.
            tile = target

    pad_rows = (-rows) % tile
    if pad_rows:
        x2 = jnp.pad(x2, ((0, pad_rows), (0, 0)))
    rows_p = rows + pad_rows

    grid = (rows_p // tile,)

    kernel = functools.partial(_layernorm_kernel, eps=eps)

    out = pl.pallas_call(
        kernel,
        out_shape=jax.ShapeDtypeStruct((rows_p, feat), x.dtype),
        grid_spec=pltpu.PrefetchScalarGridSpec(
            num_scalar_prefetch=0,
            grid=grid,
            in_specs=[
                pl.BlockSpec((tile, feat), lambda i: (i, 0)),
                pl.BlockSpec((1, feat), lambda i: (0, 0)),
                pl.BlockSpec((1, feat), lambda i: (0, 0)),
            ],
            out_specs=pl.BlockSpec((tile, feat), lambda i: (i, 0)),
        ),
        compiler_params=pltpu.CompilerParams(
            dimension_semantics=("parallel",),
            # Raise the scoped VMEM limit (v5e default is 16 MiB) while staying
            # inside v7x's 64 MiB physical VMEM.
            vmem_limit_bytes=48 * 1024 * 1024,
        ),
    )(x2, a2, b2)

    if pad_rows:
        out = out[:rows]
    return out.reshape(orig_shape)


if __name__ == "__main__":
    key = jax.random.PRNGKey(0)

    batch, seq, hidden = 2, 8, 32  # feat_size = hidden = 32
    x = jax.random.normal(key, (batch, seq, hidden), dtype=jnp.float32)

    # Deterministic parameter init matching nn.Parameter(torch.ones/zeros(feat_size))
    a = jnp.ones((hidden,), dtype=jnp.float32)
    b = jnp.zeros((hidden,), dtype=jnp.float32)

    out = layer_norm(x, a, b, eps=1e-6)
    out = jax.block_until_ready(out)

    # Reference in plain JAX (torch semantics: unbiased std, eps added to std).
    mean = jnp.mean(x, axis=-1, keepdims=True)
    std = jnp.sqrt(jnp.sum((x - mean) ** 2, axis=-1, keepdims=True) / (hidden - 1))
    ref = a * (x - mean) / (std + 1e-6) + b
    assert jnp.allclose(out, ref, atol=1e-5, rtol=1e-5), "mismatch vs reference"

    # Also exercise a non-divisible / larger row count to hit the tiling path.
    x_big = jax.random.normal(key, (3, 37, hidden), dtype=jnp.float32)
    out_big = jax.block_until_ready(layer_norm(x_big, a, b, eps=1e-6))
    mean_b = jnp.mean(x_big, axis=-1, keepdims=True)
    std_b = jnp.sqrt(jnp.sum((x_big - mean_b) ** 2, axis=-1, keepdims=True) / (hidden - 1))
    ref_b = a * (x_big - mean_b) / (std_b + 1e-6) + b
    assert jnp.allclose(out_big, ref_b, atol=1e-5, rtol=1e-5), "mismatch (tail path)"

    print("KERNEL_OK")
</pallas_src>

<mosaic_0001>
module attributes {stable_mosaic.version = 11 : i64} {
  func.func @_layernorm_kernel(%arg0: i32, %arg1: memref<16x32xf32, #tpu.memory_space<vmem>>, %arg2: memref<1x32xf32, #tpu.memory_space<vmem>>, %arg3: memref<1x32xf32, #tpu.memory_space<vmem>>, %arg4: memref<16x32xf32, #tpu.memory_space<vmem>>) attributes {dimension_semantics = [#tpu.dimension_semantics<parallel>], iteration_bounds = array<i64: 1>, scalar_prefetch = 0 : i64, scratch_operands = 0 : i64, tpu.core_type = #tpu.core_type<tc>, window_params = [{transform_indices = @transform_0, window_bounds = array<i64: 16, 32>}, {pipeline_mode = #tpu.pipeline_mode<synchronous>, transform_indices = @transform_1, window_bounds = array<i64: 1, 32>}, {pipeline_mode = #tpu.pipeline_mode<synchronous>, transform_indices = @transform_2, window_bounds = array<i64: 1, 32>}, {transform_indices = @transform_3, window_bounds = array<i64: 16, 32>}]} {
    %c0 = arith.constant 0 : index
    %c0_0 = arith.constant 0 : index
    %0 = vector.load %arg1[%c0, %c0_0] : memref<16x32xf32, #tpu.memory_space<vmem>>, vector<16x32xf32>
    %cst = arith.constant dense<0.000000e+00> : vector<16xf32>
    %1 = vector.multi_reduction <add>, %0, %cst [1] : vector<16x32xf32> to vector<16xf32>
    %2 = vector.shape_cast %1 : vector<16xf32> to vector<16x1xf32>
    %cst_1 = arith.constant 3.200000e+01 : f32
    %3 = vector.broadcast %cst_1 : f32 to vector<16x1xf32>
    %4 = arith.divf %2, %3 : vector<16x1xf32>
    %5 = vector.broadcast %4 : vector<16x1xf32> to vector<16x32xf32>
    %6 = arith.subf %0, %5 : vector<16x32xf32>
    %7 = arith.mulf %6, %6 : vector<16x32xf32>
    %cst_2 = arith.constant dense<0.000000e+00> : vector<16xf32>
    %8 = vector.multi_reduction <add>, %7, %cst_2 [1] : vector<16x32xf32> to vector<16xf32>
    %9 = vector.shape_cast %8 : vector<16xf32> to vector<16x1xf32>
    %cst_3 = arith.constant 3.100000e+01 : f32
    %10 = vector.broadcast %cst_3 : f32 to vector<16x1xf32>
    %11 = arith.divf %9, %10 : vector<16x1xf32>
    %12 = math.sqrt %11 : vector<16x1xf32>
    %cst_4 = arith.constant 9.99999997E-7 : f32
    %13 = vector.broadcast %cst_4 : f32 to vector<16x1xf32>
    %14 = arith.addf %12, %13 : vector<16x1xf32>
    %15 = tpu.reciprocal %14 : vector<16x1xf32> -> vector<16x1xf32>
    %c0_5 = arith.constant 0 : index
    %c0_6 = arith.constant 0 : index
    %16 = vector.load %arg2[%c0_5, %c0_6] : memref<1x32xf32, #tpu.memory_space<vmem>>, vector<1x32xf32>
    %c0_7 = arith.constant 0 : index
    %c0_8 = arith.constant 0 : index
    %17 = vector.load %arg3[%c0_7, %c0_8] : memref<1x32xf32, #tpu.memory_space<vmem>>, vector<1x32xf32>
    %18 = vector.broadcast %15 : vector<16x1xf32> to vector<16x32xf32>
    %19 = arith.mulf %6, %18 : vector<16x32xf32>
    %20 = vector.broadcast %16 : vector<1x32xf32> to vector<16x32xf32>
    %21 = arith.mulf %19, %20 : vector<16x32xf32>
    %22 = vector.broadcast %17 : vector<1x32xf32> to vector<16x32xf32>
    %23 = arith.addf %21, %22 : vector<16x32xf32>
    %c0_9 = arith.constant 0 : index
    %c0_10 = arith.constant 0 : index
    %24 = vector.load %arg4[%c0_9, %c0_10] : memref<16x32xf32, #tpu.memory_space<vmem>>, vector<16x32xf32>
    tpu.vector_store %arg4[%c0_9, %c0_10], %23 {strides = array<i32>} : memref<16x32xf32, #tpu.memory_space<vmem>>, vector<16x32xf32>,
    return
  }
  func.func @transform_0(%arg0: i32) -> (i32, i32) {
    %c0_i32 = arith.constant 0 : i32
    %c0_i32_0 = arith.constant 0 : i32
    return %arg0, %c0_i32 : i32, i32
  }
  func.func @transform_1(%arg0: i32) -> (i32, i32) {
    %c0_i32 = arith.constant 0 : i32
    %c0_i32_0 = arith.constant 0 : i32
    %c0_i32_1 = arith.constant 0 : i32
    return %c0_i32, %c0_i32_0 : i32, i32
  }
  func.func @transform_2(%arg0: i32) -> (i32, i32) {
    %c0_i32 = arith.constant 0 : i32
    %c0_i32_0 = arith.constant 0 : i32
    %c0_i32_1 = arith.constant 0 : i32
    return %c0_i32, %c0_i32_0 : i32, i32
  }
  func.func @transform_3(%arg0: i32) -> (i32, i32) {
    %c0_i32 = arith.constant 0 : i32
    %c0_i32_0 = arith.constant 0 : i32
    return %arg0, %c0_i32 : i32, i32
  }
}

</mosaic_0001>

<llo_original>
// kernel: tpu_custom_call.1
$region0: #{tpu_custom_call.1}
  #allocation0 [shape = 'u32[]', space=smem, size = 0x4, offset = 0x4, fixed_abs, tag = 'smem constant byte address 0x4 - core index']
  #allocation1 [shape = 'u32[144,128]{1,0:T(1,128)}', space=vmem, size = 0x12000, scoped, tag = 'internal scratch']
  %s0 = inlined_call_operand.hbm [shape: f32[16,32], index: 0, kind: input, shape index: {}]
  %s1 = inlined_call_operand.vmem [shape: f32[1,32], index: 1, kind: input, shape index: {}]
  %s2 = inlined_call_operand.vmem [shape: f32[1,32], index: 2, kind: input, shape index: {}]
  %s3 = inlined_call_operand.hbm [shape: f32[16,32], index: 3, kind: output, shape index: {}]
  %s4 = sld [smem:[#allocation0]]
  $region26: #{tpu_custom_call.1} parent=0
    _
  %s6 = ssub.s32 1, %s4
  %s7 = scalar_select 0, %s6, %s4
  $region1: #{tpu_custom_call.1} parent=0
    #allocation2 [shape = 'u8[8192]{0}', space=vmem, size = 0x2000, scoped, tag = 'input window, operand 0, single buffered']
    #allocation3 [shape = 's32[1]{0}', space=sflag, size = 0x4, scoped, tag = 'scoped memory for tpu_custom_call.1']
    #allocation4 [shape = 's32[1]{0}', space=sflag, size = 0x4, scoped, tag = 'scoped memory for tpu_custom_call.1']
    #allocation5 [shape = 'u8[8192]{0}', space=vmem, size = 0x2000, scoped, tag = 'output window, operand 0, single buffered']
    %8 = vsyncpa [#allocation3], 0
    %9 = vsyncpa [#allocation4], 0
    // Predicated region
    $region2: #{tpu_custom_call.1} parent=1 // pred_check
      _
    $region3: #{tpu_custom_call.1} parent=1 // pred_check_branch
      %11 = sbr.rel (0) target = $region5
    $region4: #{tpu_custom_call.1} parent=1 // pred_region
      %s13 = ssub.s32 256, 256
      %14 = vsyncadd [#allocation3], %s13
      %s15 = sshll.u32 [#allocation2], 4
      %s16 = int_to_ptr.vmem [resolvable:$true] %s15
      %21 = dma.hbm_to_vmem [thread:$0]  %s0, 256, %s16, [#allocation3], 128, 128, 8
    $region5: #{tpu_custom_call.1} parent=1 // pred_fallthru
      _
    // Predicated region
    $region6: #{tpu_custom_call.1} parent=1 // pred_check
      _
    $region7: #{tpu_custom_call.1} parent=1 // pred_check_branch
      %23 = sbr.rel (0) target = $region9
    $region8: #{tpu_custom_call.1} parent=1 // pred_region
      _
    $region9: #{tpu_custom_call.1} parent=1 // pred_fallthru
      _
    // Predicated region
    $region10: #{tpu_custom_call.1} parent=1 // pred_check
      _
    $region11: #{tpu_custom_call.1} parent=1 // pred_check_branch
      %25 = sbr.rel (0) target = $region13
    $region12: #{tpu_custom_call.1} parent=1 // pred_region
      _
    $region13: #{tpu_custom_call.1} parent=1 // pred_fallthru
      _
    // Predicated region
    $region14: #{tpu_custom_call.1} parent=1 // pred_check
      _
    $region15: #{tpu_custom_call.1} parent=1 // pred_check_branch
      %27 = sbr.rel (0) target = $region17
    $region16: #{tpu_custom_call.1} parent=1 // pred_region
      %28 = dma.done [#allocation3], 256
    $region17: #{tpu_custom_call.1} parent=1 // pred_fallthru
      _
    %v29 = vld [vmem:[#allocation2] sm:$0xff]
    %v30 = vld [vmem:[#allocation2 + $0x8] sm:$0xff]
    %vm31 = vcmask 261120
    %v32 = vsel %vm31, %v29, 0.0
    %33 = vadd.xlane.f32.xlu0 %v32
    %v34 = vpop.xlane.xlu0 %33
    %v35 = vsel %vm31, %v30, 0.0
    %36 = vadd.xlane.f32.xlu0 %v35
    %v37 = vpop.xlane.xlu0 %36
    %v38 = vrcp.pop 32.0
    %v39 = vmul.f32 %v34, %v38
    %v40 = vmul.f32 %v37, %v38
    %v41 = vsub.f32 %v29, %v39
    %v42 = vsub.f32 %v30, %v40
    %v43 = vmul.f32 %v41, %v41
    %v44 = vmul.f32 %v42, %v42
    %v45 = vsel %vm31, %v43, 0.0
    %46 = vadd.xlane.f32.xlu0 %v45
    %v47 = vpop.xlane.xlu0 %46
    %v48 = vsel %vm31, %v44, 0.0
    %49 = vadd.xlane.f32.xlu0 %v48
    %v50 = vpop.xlane.xlu0 %49
    %v51 = vrcp.pop 31.0
    %v52 = vmul.f32 %v47, %v51
    %v53 = vmul.f32 %v50, %v51
    %v54 = vrsqrt.pop %v52
    %v55 = vmul.f32 %v52, %v54
    %vm56 = vcmp.eq.f32.partialorder %v52, inf
    %v57 = vsel %vm56, %v52, %v55
    %vm58 = vcmp.eq.f32.partialorder %v52, 0.0
    %v59 = vand.u32 %v52, 2147483648
    %v60 = vsel %vm58, %v59, %v57
    %v61 = vrsqrt.pop %v53
    %v62 = vmul.f32 %v53, %v61
    %vm63 = vcmp.eq.f32.partialorder %v53, inf
    %v64 = vsel %vm63, %v53, %v62
    %vm65 = vcmp.eq.f32.partialorder %v53, 0.0
    %v66 = vand.u32 %v53, 2147483648
    %v67 = vsel %vm65, %v66, %v64
    %v68 = vadd.f32 %v60, 1e-06
    %v69 = vadd.f32 %v67, 1e-06
    %v70 = vrcp.pop %v68
    %v71 = vrcp.pop %v69
    %v72 = vld [vmem:[%s1] sm:$0x1]
    %v73 = vld [vmem:[%s2] sm:$0x1]
    %v74 = vmul.f32 %v41, %v70
    %v75 = vmul.f32 %v42, %v71
    %v77 = vlaneseq
    %v78 = vshrl.u32 %v77, 7
    %v79 = vsub.s32 0, %v78
    %v80 = vrot.slane %v72, %v79
    %v82 = vmul.f32 %v74, %v80
    %v83 = vmul.f32 %v75, %v80
    %v85 = vlaneseq
    %v86 = vshrl.u32 %v85, 7
    %v87 = vsub.s32 0, %v86
    %v88 = vrot.slane %v73, %v87
    %v90 = vadd.f32 %v82, %v88
    %v91 = vadd.f32 %v83, %v88
    %92 = vst.msk [vmem:[#allocation5] sm:$0xff] %vm31, %v90
    %93 = vst.msk [vmem:[#allocation5 + $0x8] sm:$0xff] %vm31, %v91
    // Predicated region
    $region18: #{tpu_custom_call.1} parent=1 // pred_check
      _
    $region19: #{tpu_custom_call.1} parent=1 // pred_check_branch
      %95 = sbr.rel (0) target = $region21
    $region20: #{tpu_custom_call.1} parent=1 // pred_region
      %s97 = ssub.s32 256, 256
      %98 = vsyncadd [#allocation4], %s97
      %s99 = sshll.u32 [#allocation5], 4
      %s100 = int_to_ptr.vmem [resolvable:$true] %s99
      %105 = dma.vmem_to_hbm [thread:$0]  %s100, 256, %s3, [#allocation4], 128, 128, 8
    $region21: #{tpu_custom_call.1} parent=1 // pred_fallthru
      _
    // Predicated region
    $region22: #{tpu_custom_call.1} parent=1 // pred_check
      _
    $region23: #{tpu_custom_call.1} parent=1 // pred_check_branch
      %107 = sbr.rel (0) target = $region25
    $region24: #{tpu_custom_call.1} parent=1 // pred_region
      %108 = dma.done [#allocation4], 256
    $region25: #{tpu_custom_call.1} parent=1 // pred_fallthru
      _
    %109 = vsyncpa [#allocation3], 1
    %110 = vsyncpa [#allocation4], 1

</llo_original>
